<compile_context>
chip_gen: v5e
topology: v5e:2x2
jax: 0.10.0
libtpu: 0.0.40
codegen_flags: <defaults>
</compile_context>

<pallas_src>
import functools

import jax
import jax.numpy as jnp
from jax import lax
from jax.experimental import pallas as pl
from jax.experimental.pallas import tpu as pltpu

BN_EPS = 1e-5
NEG_SLOPE = 0.2
KH = KW = 4
STRIDE = 2
PAD = 1
LANE = 128


def _round_up(x, m):
    return (x + m - 1) // m * m


def _vmem_capacity_bytes():
    try:
        return int(pltpu.get_tpu_info().vmem_capacity_bytes)
    except Exception:
        return 64 << 20  # conservative: v7x per-TensorCore VMEM


def _pick_conv_row_tile(ho, wo, ws, kc, cpad, y_bytes, budget):
    """Largest divisor `th` of `ho` whose phase-1 VMEM working set fits `budget`;
    prefers th*wo a multiple of 256 (MXU M on v6e/v7x) when it costs <=2x in size."""
    def footprint(th):
        in_t = (th + 1) * ws * kc * 2        # bf16 input tile (double-buffered x2 below)
        out_t = th * wo * cpad * y_bytes     # conv-activation tile
        acc_t = th * wo * cpad * 4           # f32 accumulator
        win_t = th * wo * kc * 2             # relayout'd tap window
        return 2 * in_t + 2 * out_t + acc_t + win_t

    divs = [d for d in range(1, ho + 1) if ho % d == 0 and footprint(d) <= budget]
    if not divs:
        return 1  # TODO(synk): masked last tile / batch folding to avoid this perf cliff
    best = max(divs)
    for pref in (256, 128):
        cands = [d for d in divs if (d * wo) % pref == 0 and 2 * d >= best]
        if cands:
            return max(cands)
    return best


def _pick_phase2_rows(m, cpad, out_bytes, budget):
    """Row block for the streaming affine/LeakyReLU pass: as large as fits the
    budget, a multiple of 8 (sublane), ideally a divisor of m (no padding).
    Returns (row_block, padded_rows)."""
    per_row = cpad * (2 + out_bytes) * 2     # bf16 in + out, double-buffered
    max_rows = max(8, min(8192, (budget // per_row) // 8 * 8))
    if m <= max_rows:
        return m, m
    for d in range(max_rows, 7, -8):         # prefer a divisor of m
        if m % d == 0:
            return d, m
    return max_rows, _round_up(m, max_rows)


# ----------------------------------------------------------------------------
# Phase 1: conv (4-tap decomposition on the MXU) + per-tile BN partials
# ----------------------------------------------------------------------------
def _conv_stats_kernel(x_ref, w_ref, y_ref, stats_ref, *, th, wo, kc, cpad):
    # x_ref:     (1, th+1, Ws, Kc)  bf16 space-to-depth tile, halo pre-tiled on host
    # w_ref:     (4, Kc, Cpad)      bf16 weight taps (grid-invariant)
    # y_ref:     (1, th*Wo, Cpad)   conv activations (compute dtype, e.g. bf16)
    # stats_ref: (1, 2, Cpad)       f32 per-tile (sum, centered sum-of-squares)
    m_rows = th * wo
    acc = jnp.zeros((m_rows, cpad), jnp.float32)
    for dh in range(2):
        for dw in range(2):
            win = x_ref[0, dh:dh + th, dw:dw + wo, :]          # (th, wo, kc)
            win = win.reshape(m_rows, kc)
            acc = acc + jnp.dot(win, w_ref[2 * dh + dw],       # MXU, f32 accumulate
                                preferred_element_type=jnp.float32)

    y_ref[0] = acc.astype(y_ref.dtype)

    # Per-tile BN partials in f32 from the f32 accumulator.  Centered
    # sum-of-squares (merged with Chan's formula in the glue) avoids the
    # E[y^2]-E[y]^2 cancellation of the previous version.
    s = jnp.sum(acc, axis=0, keepdims=True)                    # (1, cpad)
    mu = s * (1.0 / m_rows)
    d = acc - mu
    css = jnp.sum(d * d, axis=0, keepdims=True)
    stats_ref[0, 0:1, :] = s
    stats_ref[0, 1:2, :] = css


# ----------------------------------------------------------------------------
# Phase 2: y * scale + shift, then LeakyReLU(0.2)   (pure HBM streaming)
# ----------------------------------------------------------------------------
def _affine_lrelu_kernel(y_ref, a_ref, b_ref, o_ref):
    y = y_ref[...].astype(jnp.float32)                         # (rows, Cpad)
    t = y * a_ref[...] + b_ref[...]                            # (1, Cpad) broadcasts
    o_ref[...] = jnp.where(t > 0, t, NEG_SLOPE * t).astype(o_ref.dtype)


def unet_block_forward(x_nchw, weight_oihw, gamma, beta, *,
                       compute_dtype=jnp.bfloat16, out_dtype=jnp.float32,
                       nchw_output=True):
    """UNetBlock(down=True): Conv2d(k4,s2,p1,bias=False) -> BatchNorm2d (batch
    stats) -> LeakyReLU(0.2).

    x: (N, Cin, H, W); weight: (Cout, Cin, 4, 4); gamma/beta: (Cout,).
    When chaining blocks prefer out_dtype=jnp.bfloat16 and nchw_output=False to
    skip an extra HBM round trip of the largest tensor.
    """
    N, Cin, H, W = x_nchw.shape
    Cout = weight_oihw.shape[0]
    Ho = (H + 2 * PAD - KH) // STRIDE + 1
    Wo = (W + 2 * PAD - KW) // STRIDE + 1
    assert H == 2 * Ho and W == 2 * Wo, "k=4, s=2, p=1 expects even H and W"

    # Lane-dense padding: Cout to a multiple of 128; Cin so K-per-tap (4*Cin)
    # is a multiple of 128 (only pads small-Cin layers).
    Cin_p = _round_up(Cin, 32)
    Kc = 4 * Cin_p
    Cpad = _round_up(Cout, LANE)
    Hs, Ws = Ho + 1, Wo + 1
    M = N * Ho * Wo

    vmem_cap = _vmem_capacity_bytes()
    vmem_limit = int(0.85 * vmem_cap)           # headroom for compiler scratch
    y_bytes = jnp.dtype(compute_dtype).itemsize
    out_bytes = jnp.dtype(out_dtype).itemsize

    w_bytes_tot = 4 * Kc * Cpad * 2
    # Single-buffer the grid-invariant weight taps when they are large (v7x:
    # an 8 MiB tap set would otherwise cost 16 MiB of 64 MiB VMEM).
    w_single_buffer = w_bytes_tot >= (1 << 20)
    w_bufs = 1 if w_single_buffer else 2
    tile_budget = max(int(0.45 * vmem_cap) - w_bufs * w_bytes_tot, 1 << 20)
    th = _pick_conv_row_tile(Ho, Wo, Ws, Kc, Cpad, y_bytes, tile_budget)
    nt = Ho // th

    # --- host glue (all in bf16): NCHW -> NHWC -> pad -> 2x2 space-to-depth ---
    x = jnp.transpose(x_nchw, (0, 2, 3, 1)).astype(compute_dtype)       # (N,H,W,Cin)
    xp = jnp.pad(x, ((0, 0), (PAD, PAD), (PAD, PAD), (0, Cin_p - Cin)))  # one pad call
    xs = xp.reshape(N, Hs, 2, Ws, 2, Cin_p)
    xs = xs.transpose(0, 1, 3, 2, 4, 5).reshape(N, Hs, Ws, Kc)           # ch = (ph_h, ph_w, ci)
    # Pre-tile the +1-row halo on the host (duplicates nt boundary rows once).
    row_idx = jnp.arange(nt)[:, None] * th + jnp.arange(th + 1)[None, :]
    xs_t = xs[:, row_idx].reshape(N * nt, th + 1, Ws, Kc)                # (N*nt, th+1, Ws, Kc)

    # --- weights: (Cout,Cin,4,4) -> 4 taps of (Kc, Cpad), bf16 ----------------
    w = jnp.pad(weight_oihw.astype(jnp.float32),
                ((0, Cpad - Cout), (0, Cin_p - Cin), (0, 0), (0, 0)))
    w = jnp.transpose(w, (2, 3, 1, 0))                                   # (kh, kw, ci, co)
    w = w.reshape(2, 2, 2, 2, Cin_p, Cpad)                               # (dh, ph_h, dw, ph_w, ci, co)
    w_taps = jnp.transpose(w, (0, 2, 1, 3, 4, 5)).reshape(4, Kc, Cpad)
    w_taps = w_taps.astype(compute_dtype)

    w_spec_kwargs = {"pipeline_mode": pl.Buffered(1)} if w_single_buffer else {}
    kern1 = functools.partial(_conv_stats_kernel, th=th, wo=Wo, kc=Kc, cpad=Cpad)

    # --- phase 1: conv + BN partials ------------------------------------------
    y, stats = pl.pallas_call(
        kern1,
        grid=(N * nt,),
        in_specs=[
            pl.BlockSpec((1, th + 1, Ws, Kc), lambda i: (i, 0, 0, 0)),
            pl.BlockSpec((4, Kc, Cpad), lambda i: (0, 0, 0), **w_spec_kwargs),
        ],
        out_specs=(
            pl.BlockSpec((1, th * Wo, Cpad), lambda i: (i, 0, 0)),
            pl.BlockSpec((1, 2, Cpad), lambda i: (i, 0, 0)),
        ),
        out_shape=(
            jax.ShapeDtypeStruct((N * nt, th * Wo, Cpad), compute_dtype),
            jax.ShapeDtypeStruct((N * nt, 2, Cpad), jnp.float32),
        ),
        compiler_params=pltpu.CompilerParams(
            dimension_semantics=("parallel",),
            vmem_limit_bytes=vmem_limit),
    )(xs_t, w_taps)

    # --- glue: Chan-merge the per-tile partials, build per-channel affine ------
    m_tile = float(th * Wo)
    tile_sum = stats[:, 0, :]                                            # (N*nt, Cpad)
    tile_css = stats[:, 1, :]
    mean = jnp.sum(tile_sum, axis=0) / M
    mu_t = tile_sum / m_tile
    var = (jnp.sum(tile_css, axis=0)
           + m_tile * jnp.sum((mu_t - mean) ** 2, axis=0)) / M
    var = jnp.maximum(var, 0.0)
    g = jnp.pad(gamma.astype(jnp.float32), (0, Cpad - Cout))
    b = jnp.pad(beta.astype(jnp.float32), (0, Cpad - Cout))
    scale_v = g * lax.rsqrt(var + BN_EPS)
    shift_v = b - mean * scale_v
    scale2 = scale_v.reshape(1, Cpad)
    shift2 = shift_v.reshape(1, Cpad)

    # --- phase 2: affine + LeakyReLU (streaming, tiling decoupled from th) -----
    y2 = y.reshape(M, Cpad)                                              # contiguous view
    row_blk, M_pad = _pick_phase2_rows(M, Cpad, out_bytes, int(0.45 * vmem_cap))
    if M_pad != M:
        y2 = jnp.pad(y2, ((0, M_pad - M), (0, 0)))
    n_blk = M_pad // row_blk

    out = pl.pallas_call(
        _affine_lrelu_kernel,
        grid=(n_blk,),
        in_specs=[
            pl.BlockSpec((row_blk, Cpad), lambda i: (i, 0)),
            pl.BlockSpec((1, Cpad), lambda i: (0, 0)),
            pl.BlockSpec((1, Cpad), lambda i: (0, 0)),
        ],
        out_specs=pl.BlockSpec((row_blk, Cpad), lambda i: (i, 0)),
        out_shape=jax.ShapeDtypeStruct((M_pad, Cpad), out_dtype),
        compiler_params=pltpu.CompilerParams(
            dimension_semantics=("parallel",),
            vmem_limit_bytes=vmem_limit),
    )(y2, scale2, shift2)

    out = out[:M, :Cout].reshape(N, Ho, Wo, Cout)                        # drop padding
    if nchw_output:
        # NOTE: prefer nchw_output=False when chaining blocks — this transpose is
        # an extra full HBM read+write of the largest tensor.
        out = jnp.transpose(out, (0, 3, 1, 2))                           # (N, Cout, Ho, Wo)
    return out


def _reference_forward(x_nchw, weight_oihw, gamma, beta):
    """Pure-JAX f32 reference mirroring the PyTorch module (training-mode BN)."""
    y = lax.conv_general_dilated(
        x_nchw, weight_oihw, window_strides=(STRIDE, STRIDE),
        padding=((PAD, PAD), (PAD, PAD)),
        dimension_numbers=("NCHW", "OIHW", "NCHW"))
    mean = jnp.mean(y, axis=(0, 2, 3), keepdims=True)
    var = jnp.mean((y - mean) ** 2, axis=(0, 2, 3), keepdims=True)       # biased
    y = (y - mean) * lax.rsqrt(var + BN_EPS)
    y = y * gamma.reshape(1, -1, 1, 1) + beta.reshape(1, -1, 1, 1)
    return jnp.where(y > 0, y, NEG_SLOPE * y)


if __name__ == "__main__":
    key = jax.random.PRNGKey(0)
    k_x, k_w, k_g, k_b = jax.random.split(key, 4)

    N, Cin, H, W = 2, 4, 16, 16
    Cout = 8

    x = jax.random.normal(k_x, (N, Cin, H, W), dtype=jnp.float32)
    weight = jax.random.normal(k_w, (Cout, Cin, KH, KW), dtype=jnp.float32) * 0.1
    gamma = 1.0 + 0.1 * jax.random.normal(k_g, (Cout,), dtype=jnp.float32)
    beta = 0.1 * jax.random.normal(k_b, (Cout,), dtype=jnp.float32)

    fwd = jax.jit(unet_block_forward)
    out = jax.block_until_ready(fwd(x, weight, gamma, beta))

    # Check against a reference fed bf16-quantized inputs (tight tol; slack covers
    # the intentional bf16 activation round-trip between phases), plus a looser
    # check against the pure-f32 PyTorch-semantics reference.
    xq = x.astype(jnp.bfloat16).astype(jnp.float32)
    wq = weight.astype(jnp.bfloat16).astype(jnp.float32)
    ref_bf16 = jax.block_until_ready(_reference_forward(xq, wq, gamma, beta))
    ref_f32 = jax.block_until_ready(_reference_forward(x, weight, gamma, beta))

    assert out.shape == (N, Cout, H // 2, W // 2), out.shape
    assert jnp.allclose(out, ref_bf16, atol=1e-2, rtol=1e-2), \
        float(jnp.max(jnp.abs(out - ref_bf16)))
    assert jnp.allclose(out, ref_f32, atol=5e-2, rtol=5e-2), \
        float(jnp.max(jnp.abs(out - ref_f32)))
    print("KERNEL_OK")
</pallas_src>

<mosaic_0001>
module attributes {stable_mosaic.version = 11 : i64} {
  func.func @_conv_stats_kernel(%arg0: i32, %arg1: memref<1x9x9x128xbf16, #tpu.memory_space<vmem>>, %arg2: memref<4x128x128xbf16, #tpu.memory_space<vmem>>, %arg3: memref<1x64x128xbf16, #tpu.memory_space<vmem>>, %arg4: memref<1x2x128xf32, #tpu.memory_space<vmem>>) attributes {dimension_semantics = [#tpu.dimension_semantics<parallel>], iteration_bounds = array<i64: 2>, scalar_prefetch = 0 : i64, scratch_operands = 0 : i64, tpu.core_type = #tpu.core_type<tc>, window_params = [{transform_indices = @transform_0, window_bounds = array<i64: 1, 9, 9, 128>}, {pipeline_mode = #tpu.pipeline_mode<synchronous>, transform_indices = @transform_1, window_bounds = array<i64: 4, 128, 128>}, {transform_indices = @transform_2, window_bounds = array<i64: 1, 64, 128>}, {transform_indices = @transform_3, window_bounds = array<i64: 1, 2, 128>}]} {
    %cst = arith.constant 0.000000e+00 : f32
    %0 = vector.broadcast %cst : f32 to vector<64x128xf32>
    %c0 = arith.constant 0 : index
    %c0_0 = arith.constant 0 : index
    %c0_1 = arith.constant 0 : index
    %c0_2 = arith.constant 0 : index
    %1 = vector.load %arg1[%c0, %c0_0, %c0_1, %c0_2] : memref<1x9x9x128xbf16, #tpu.memory_space<vmem>>, vector<1x8x8x128xbf16>
    %2 = vector.shape_cast %1 : vector<1x8x8x128xbf16> to vector<8x8x128xbf16>
    %3 = vector.shape_cast %2 : vector<8x8x128xbf16> to vector<64x128xbf16>
    %c0_3 = arith.constant 0 : index
    %c0_4 = arith.constant 0 : index
    %c0_5 = arith.constant 0 : index
    %4 = vector.load %arg2[%c0_3, %c0_4, %c0_5] : memref<4x128x128xbf16, #tpu.memory_space<vmem>>, vector<1x128x128xbf16>
    %5 = vector.shape_cast %4 : vector<1x128x128xbf16> to vector<128x128xbf16>
    %cst_6 = arith.constant dense<0.000000e+00> : vector<64x128xf32>
    %6 = tpu.matmul %3, %5, %cst_6 {dimension_numbers = #tpu.dot_dimension_numbers<[1], [0], [0], [1], [0, 0, 1, 1], [], []>} : vector<64x128xbf16>, vector<128x128xbf16>, vector<64x128xf32> -> vector<64x128xf32>
    %7 = arith.addf %0, %6 : vector<64x128xf32>
    %c0_7 = arith.constant 0 : index
    %c0_8 = arith.constant 0 : index
    %c1 = arith.constant 1 : index
    %c0_9 = arith.constant 0 : index
    %8 = vector.load %arg1[%c0_7, %c0_8, %c1, %c0_9] : memref<1x9x9x128xbf16, #tpu.memory_space<vmem>>, vector<1x8x8x128xbf16>
    %9 = vector.shape_cast %8 : vector<1x8x8x128xbf16> to vector<8x8x128xbf16>
    %10 = vector.shape_cast %9 : vector<8x8x128xbf16> to vector<64x128xbf16>
    %c1_10 = arith.constant 1 : index
    %c0_11 = arith.constant 0 : index
    %c0_12 = arith.constant 0 : index
    %11 = vector.load %arg2[%c1_10, %c0_11, %c0_12] : memref<4x128x128xbf16, #tpu.memory_space<vmem>>, vector<1x128x128xbf16>
    %12 = vector.shape_cast %11 : vector<1x128x128xbf16> to vector<128x128xbf16>
    %cst_13 = arith.constant dense<0.000000e+00> : vector<64x128xf32>
    %13 = tpu.matmul %10, %12, %cst_13 {dimension_numbers = #tpu.dot_dimension_numbers<[1], [0], [0], [1], [0, 0, 1, 1], [], []>} : vector<64x128xbf16>, vector<128x128xbf16>, vector<64x128xf32> -> vector<64x128xf32>
    %14 = arith.addf %7, %13 : vector<64x128xf32>
    %c0_14 = arith.constant 0 : index
    %c1_15 = arith.constant 1 : index
    %c0_16 = arith.constant 0 : index
    %c0_17 = arith.constant 0 : index
    %15 = vector.load %arg1[%c0_14, %c1_15, %c0_16, %c0_17] : memref<1x9x9x128xbf16, #tpu.memory_space<vmem>>, vector<1x8x8x128xbf16>
    %16 = vector.shape_cast %15 : vector<1x8x8x128xbf16> to vector<8x8x128xbf16>
    %17 = vector.shape_cast %16 : vector<8x8x128xbf16> to vector<64x128xbf16>
    %c2 = arith.constant 2 : index
    %c0_18 = arith.constant 0 : index
    %c0_19 = arith.constant 0 : index
    %18 = vector.load %arg2[%c2, %c0_18, %c0_19] : memref<4x128x128xbf16, #tpu.memory_space<vmem>>, vector<1x128x128xbf16>
    %19 = vector.shape_cast %18 : vector<1x128x128xbf16> to vector<128x128xbf16>
    %cst_20 = arith.constant dense<0.000000e+00> : vector<64x128xf32>
    %20 = tpu.matmul %17, %19, %cst_20 {dimension_numbers = #tpu.dot_dimension_numbers<[1], [0], [0], [1], [0, 0, 1, 1], [], []>} : vector<64x128xbf16>, vector<128x128xbf16>, vector<64x128xf32> -> vector<64x128xf32>
    %21 = arith.addf %14, %20 : vector<64x128xf32>
    %c0_21 = arith.constant 0 : index
    %c1_22 = arith.constant 1 : index
    %c1_23 = arith.constant 1 : index
    %c0_24 = arith.constant 0 : index
    %22 = vector.load %arg1[%c0_21, %c1_22, %c1_23, %c0_24] : memref<1x9x9x128xbf16, #tpu.memory_space<vmem>>, vector<1x8x8x128xbf16>
    %23 = vector.shape_cast %22 : vector<1x8x8x128xbf16> to vector<8x8x128xbf16>
    %24 = vector.shape_cast %23 : vector<8x8x128xbf16> to vector<64x128xbf16>
    %c3 = arith.constant 3 : index
    %c0_25 = arith.constant 0 : index
    %c0_26 = arith.constant 0 : index
    %25 = vector.load %arg2[%c3, %c0_25, %c0_26] : memref<4x128x128xbf16, #tpu.memory_space<vmem>>, vector<1x128x128xbf16>
    %26 = vector.shape_cast %25 : vector<1x128x128xbf16> to vector<128x128xbf16>
    %cst_27 = arith.constant dense<0.000000e+00> : vector<64x128xf32>
    %27 = tpu.matmul %24, %26, %cst_27 {dimension_numbers = #tpu.dot_dimension_numbers<[1], [0], [0], [1], [0, 0, 1, 1], [], []>} : vector<64x128xbf16>, vector<128x128xbf16>, vector<64x128xf32> -> vector<64x128xf32>
    %28 = arith.addf %21, %27 : vector<64x128xf32>
    %29 = arith.truncf %28 : vector<64x128xf32> to vector<64x128xbf16>
    %c0_28 = arith.constant 0 : index
    %c0_29 = arith.constant 0 : index
    %c0_30 = arith.constant 0 : index
    %30 = vector.load %arg3[%c0_28, %c0_29, %c0_30] : memref<1x64x128xbf16, #tpu.memory_space<vmem>>, vector<1x64x128xbf16>
    %31 = vector.shape_cast %30 : vector<1x64x128xbf16> to vector<64x128xbf16>
    %32 = vector.shape_cast %29 : vector<64x128xbf16> to vector<1x64x128xbf16>
    tpu.vector_store %arg3[%c0_28, %c0_29, %c0_30], %32 {strides = array<i32>} : memref<1x64x128xbf16, #tpu.memory_space<vmem>>, vector<1x64x128xbf16>,
    %cst_31 = arith.constant dense<0.000000e+00> : vector<128xf32>
    %33 = vector.multi_reduction <add>, %28, %cst_31 [0] : vector<64x128xf32> to vector<128xf32>
    %34 = vector.shape_cast %33 : vector<128xf32> to vector<1x128xf32>
    %cst_32 = arith.constant 1.562500e-02 : f32
    %35 = vector.broadcast %cst_32 : f32 to vector<1x128xf32>
    %36 = arith.mulf %34, %35 : vector<1x128xf32>
    %37 = vector.broadcast %36 : vector<1x128xf32> to vector<64x128xf32>
    %38 = arith.subf %28, %37 : vector<64x128xf32>
    %39 = arith.mulf %38, %38 : vector<64x128xf32>
    %cst_33 = arith.constant dense<0.000000e+00> : vector<128xf32>
    %40 = vector.multi_reduction <add>, %39, %cst_33 [0] : vector<64x128xf32> to vector<128xf32>
    %41 = vector.shape_cast %40 : vector<128xf32> to vector<1x128xf32>
    %c0_34 = arith.constant 0 : index
    %c0_35 = arith.constant 0 : index
    %c0_36 = arith.constant 0 : index
    %42 = vector.load %arg4[%c0_34, %c0_35, %c0_36] : memref<1x2x128xf32, #tpu.memory_space<vmem>>, vector<1x1x128xf32>
    %43 = vector.shape_cast %42 : vector<1x1x128xf32> to vector<1x128xf32>
    %44 = vector.shape_cast %34 : vector<1x128xf32> to vector<1x1x128xf32>
    tpu.vector_store %arg4[%c0_34, %c0_35, %c0_36], %44 {strides = array<i32>} : memref<1x2x128xf32, #tpu.memory_space<vmem>>, vector<1x1x128xf32>,
    %c0_37 = arith.constant 0 : index
    %c1_38 = arith.constant 1 : index
    %c0_39 = arith.constant 0 : index
    %45 = vector.load %arg4[%c0_37, %c1_38, %c0_39] : memref<1x2x128xf32, #tpu.memory_space<vmem>>, vector<1x1x128xf32>
    %46 = vector.shape_cast %45 : vector<1x1x128xf32> to vector<1x128xf32>
    %47 = vector.shape_cast %41 : vector<1x128xf32> to vector<1x1x128xf32>
    tpu.vector_store %arg4[%c0_37, %c1_38, %c0_39], %47 {strides = array<i32>} : memref<1x2x128xf32, #tpu.memory_space<vmem>>, vector<1x1x128xf32>,
    return
  }
  func.func @transform_0(%arg0: i32) -> (i32, i32, i32, i32) {
    %c0_i32 = arith.constant 0 : i32
    %c0_i32_0 = arith.constant 0 : i32
    %c0_i32_1 = arith.constant 0 : i32
    %c0_i32_2 = arith.constant 0 : i32
    return %arg0, %c0_i32, %c0_i32_0, %c0_i32_1 : i32, i32, i32, i32
  }
  func.func @transform_1(%arg0: i32) -> (i32, i32, i32) {
    %c0_i32 = arith.constant 0 : i32
    %c0_i32_0 = arith.constant 0 : i32
    %c0_i32_1 = arith.constant 0 : i32
    %c0_i32_2 = arith.constant 0 : i32
    return %c0_i32, %c0_i32_0, %c0_i32_1 : i32, i32, i32
  }
  func.func @transform_2(%arg0: i32) -> (i32, i32, i32) {
    %c0_i32 = arith.constant 0 : i32
    %c0_i32_0 = arith.constant 0 : i32
    %c0_i32_1 = arith.constant 0 : i32
    return %arg0, %c0_i32, %c0_i32_0 : i32, i32, i32
  }
  func.func @transform_3(%arg0: i32) -> (i32, i32, i32) {
    %c0_i32 = arith.constant 0 : i32
    %c0_i32_0 = arith.constant 0 : i32
    %c0_i32_1 = arith.constant 0 : i32
    return %arg0, %c0_i32, %c0_i32_0 : i32, i32, i32
  }
}

module attributes {stable_mosaic.version = 11 : i64} {
  func.func @_affine_lrelu_kernel(%arg0: i32, %arg1: memref<128x128xbf16, #tpu.memory_space<vmem>>, %arg2: memref<1x128xf32, #tpu.memory_space<vmem>>, %arg3: memref<1x128xf32, #tpu.memory_space<vmem>>, %arg4: memref<128x128xf32, #tpu.memory_space<vmem>>) attributes {dimension_semantics = [#tpu.dimension_semantics<parallel>], iteration_bounds = array<i64: 1>, scalar_prefetch = 0 : i64, scratch_operands = 0 : i64, tpu.core_type = #tpu.core_type<tc>, window_params = [{transform_indices = @transform_0, window_bounds = array<i64: 128, 128>}, {pipeline_mode = #tpu.pipeline_mode<synchronous>, transform_indices = @transform_1, window_bounds = array<i64: 1, 128>}, {pipeline_mode = #tpu.pipeline_mode<synchronous>, transform_indices = @transform_2, window_bounds = array<i64: 1, 128>}, {transform_indices = @transform_3, window_bounds = array<i64: 128, 128>}]} {
    %c0 = arith.constant 0 : index
    %c0_0 = arith.constant 0 : index
    %0 = vector.load %arg1[%c0, %c0_0] : memref<128x128xbf16, #tpu.memory_space<vmem>>, vector<128x128xbf16>
    %1 = arith.extf %0 : vector<128x128xbf16> to vector<128x128xf32>
    %c0_1 = arith.constant 0 : index
    %c0_2 = arith.constant 0 : index
    %2 = vector.load %arg2[%c0_1, %c0_2] : memref<1x128xf32, #tpu.memory_space<vmem>>, vector<1x128xf32>
    %3 = vector.broadcast %2 : vector<1x128xf32> to vector<128x128xf32>
    %4 = arith.mulf %1, %3 : vector<128x128xf32>
    %c0_3 = arith.constant 0 : index
    %c0_4 = arith.constant 0 : index
    %5 = vector.load %arg3[%c0_3, %c0_4] : memref<1x128xf32, #tpu.memory_space<vmem>>, vector<1x128xf32>
    %6 = vector.broadcast %5 : vector<1x128xf32> to vector<128x128xf32>
    %7 = arith.addf %4, %6 : vector<128x128xf32>
    %cst = arith.constant 0.000000e+00 : f32
    %8 = vector.broadcast %cst : f32 to vector<128x128xf32>
    %9 = arith.cmpf ogt, %7, %8 : vector<128x128xf32>
    %cst_5 = arith.constant 2.000000e-01 : f32
    %10 = vector.broadcast %cst_5 : f32 to vector<128x128xf32>
    %11 = arith.mulf %10, %7 : vector<128x128xf32>
    %12 = arith.select %9, %7, %11 : vector<128x128xi1>, vector<128x128xf32>
    %c0_6 = arith.constant 0 : index
    %c0_7 = arith.constant 0 : index
    %13 = vector.load %arg4[%c0_6, %c0_7] : memref<128x128xf32, #tpu.memory_space<vmem>>, vector<128x128xf32>
    tpu.vector_store %arg4[%c0_6, %c0_7], %12 {strides = array<i32>} : memref<128x128xf32, #tpu.memory_space<vmem>>, vector<128x128xf32>,
    return
  }
  func.func @transform_0(%arg0: i32) -> (i32, i32) {
    %c0_i32 = arith.constant 0 : i32
    %c0_i32_0 = arith.constant 0 : i32
    return %arg0, %c0_i32 : i32, i32
  }
  func.func @transform_1(%arg0: i32) -> (i32, i32) {
    %c0_i32 = arith.constant 0 : i32
    %c0_i32_0 = arith.constant 0 : i32
    %c0_i32_1 = arith.constant 0 : i32
    return %c0_i32, %c0_i32_0 : i32, i32
  }
  func.func @transform_2(%arg0: i32) -> (i32, i32) {
    %c0_i32 = arith.constant 0 : i32
    %c0_i32_0 = arith.constant 0 : i32
    %c0_i32_1 = arith.constant 0 : i32
    return %c0_i32, %c0_i32_0 : i32, i32
  }
  func.func @transform_3(%arg0: i32) -> (i32, i32) {
    %c0_i32 = arith.constant 0 : i32
    %c0_i32_0 = arith.constant 0 : i32
    return %arg0, %c0_i32 : i32, i32
  }
}

</mosaic_0001>

<llo_original>
// kernel: unet_block_forward.3
$region0: #{unet_block_forward.3}
  #allocation0 [shape = 'u32[]', space=smem, size = 0x4, offset = 0x4, fixed_abs, tag = 'smem constant byte address 0x4 - core index']
  #allocation1 [shape = 'u32[72,128]{1,0:T(1,128)}', space=vmem, size = 0x9000, scoped, tag = 'internal scratch']
  %s0 = inlined_call_operand.vmem [shape: bf16[128,128], index: 0, kind: input, shape index: {}]
  %s1 = inlined_call_operand.vmem [shape: f32[1,128], index: 1, kind: input, shape index: {}]
  %s2 = inlined_call_operand.vmem [shape: f32[1,128], index: 2, kind: input, shape index: {}]
  %s3 = inlined_call_operand.vmem [shape: f32[128,128], index: 3, kind: output, shape index: {}]
  %s4 = sld [smem:[#allocation0]]
  $region22: #{unet_block_forward.3} parent=0
    _
  %s6 = ssub.s32 1, %s4
  %s7 = scalar_select 0, %s6, %s4
  // Predicated region
  $region2: #{unet_block_forward.3} parent=0 // pred_check
    _
  $region3: #{unet_block_forward.3} parent=0 // pred_check_branch
    %9 = sbr.rel (0) target = $region5
  $region4: #{unet_block_forward.3} parent=0 // pred_region
    _
  $region5: #{unet_block_forward.3} parent=0 // pred_fallthru
    _
  // Predicated region
  $region6: #{unet_block_forward.3} parent=0 // pred_check
    _
  $region7: #{unet_block_forward.3} parent=0 // pred_check_branch
    %11 = sbr.rel (0) target = $region9
  $region8: #{unet_block_forward.3} parent=0 // pred_region
    _
  $region9: #{unet_block_forward.3} parent=0 // pred_fallthru
    _
  // Predicated region
  $region10: #{unet_block_forward.3} parent=0 // pred_check
    _
  $region11: #{unet_block_forward.3} parent=0 // pred_check_branch
    %13 = sbr.rel (0) target = $region13
  $region12: #{unet_block_forward.3} parent=0 // pred_region
    _
  $region13: #{unet_block_forward.3} parent=0 // pred_fallthru
    _
  %v14 = vld [vmem:[%s0] sm:$0xf]
  %v15 = vld [vmem:[%s0 + $0x4] sm:$0xf]
  %v16 = vld [vmem:[%s0 + $0x8] sm:$0xf]
  %v17 = vld [vmem:[%s0 + $0xc] sm:$0xf]
  %v18 = vld [vmem:[%s0 + $0x10] sm:$0xf]
  %v19 = vld [vmem:[%s0 + $0x14] sm:$0xf]
  %v20 = vld [vmem:[%s0 + $0x18] sm:$0xf]
  %v21 = vld [vmem:[%s0 + $0x1c] sm:$0xf]
  %v22 = vld [vmem:[%s0 + $0x20] sm:$0xf]
  %v23 = vld [vmem:[%s0 + $0x24] sm:$0xf]
  %v24 = vld [vmem:[%s0 + $0x28] sm:$0xf]
  %v25 = vld [vmem:[%s0 + $0x2c] sm:$0xf]
  %v26 = vld [vmem:[%s0 + $0x30] sm:$0xf]
  %v27 = vld [vmem:[%s0 + $0x34] sm:$0xf]
  %v28 = vld [vmem:[%s0 + $0x38] sm:$0xf]
  %v29 = vld [vmem:[%s0 + $0x3c] sm:$0xf]
  %v30 = vunpack.c.l.bf16 %v14
  %v31 = vunpack.c.l.bf16 %v15
  %v32 = vunpack.c.l.bf16 %v16
  %v33 = vunpack.c.l.bf16 %v17
  %v34 = vunpack.c.l.bf16 %v18
  %v35 = vunpack.c.l.bf16 %v19
  %v36 = vunpack.c.l.bf16 %v20
  %v37 = vunpack.c.l.bf16 %v21
  %v38 = vunpack.c.l.bf16 %v22
  %v39 = vunpack.c.l.bf16 %v23
  %v40 = vunpack.c.l.bf16 %v24
  %v41 = vunpack.c.l.bf16 %v25
  %v42 = vunpack.c.l.bf16 %v26
  %v43 = vunpack.c.l.bf16 %v27
  %v44 = vunpack.c.l.bf16 %v28
  %v45 = vunpack.c.l.bf16 %v29
  %v46 = vld [vmem:[%s1] sm:$0x1]
  %v48 = vperm.slane %v46, 0
  %v50 = vmul.f32 %v30, %v48
  %v51 = vmul.f32 %v31, %v48
  %v52 = vmul.f32 %v32, %v48
  %v53 = vmul.f32 %v33, %v48
  %v54 = vmul.f32 %v34, %v48
  %v55 = vmul.f32 %v35, %v48
  %v56 = vmul.f32 %v36, %v48
  %v57 = vmul.f32 %v37, %v48
  %v58 = vmul.f32 %v38, %v48
  %v59 = vmul.f32 %v39, %v48
  %v60 = vmul.f32 %v40, %v48
  %v61 = vmul.f32 %v41, %v48
  %v62 = vmul.f32 %v42, %v48
  %v63 = vmul.f32 %v43, %v48
  %v64 = vmul.f32 %v44, %v48
  %v65 = vmul.f32 %v45, %v48
  %v66 = vld [vmem:[%s2] sm:$0x1]
  %v68 = vperm.slane %v66, 0
  %v70 = vadd.f32 %v50, %v68
  %v71 = vadd.f32 %v51, %v68
  %v72 = vadd.f32 %v52, %v68
  %v73 = vadd.f32 %v53, %v68
  %v74 = vadd.f32 %v54, %v68
  %v75 = vadd.f32 %v55, %v68
  %v76 = vadd.f32 %v56, %v68
  %v77 = vadd.f32 %v57, %v68
  %v78 = vadd.f32 %v58, %v68
  %v79 = vadd.f32 %v59, %v68
  %v80 = vadd.f32 %v60, %v68
  %v81 = vadd.f32 %v61, %v68
  %v82 = vadd.f32 %v62, %v68
  %v83 = vadd.f32 %v63, %v68
  %v84 = vadd.f32 %v64, %v68
  %v85 = vadd.f32 %v65, %v68
  %vm86 = vcmp.gt.f32.partialorder %v70, 0.0
  %vm87 = vcmp.gt.f32.partialorder %v71, 0.0
  %vm88 = vcmp.gt.f32.partialorder %v72, 0.0
  %vm89 = vcmp.gt.f32.partialorder %v73, 0.0
  %vm90 = vcmp.gt.f32.partialorder %v74, 0.0
  %vm91 = vcmp.gt.f32.partialorder %v75, 0.0
  %vm92 = vcmp.gt.f32.partialorder %v76, 0.0
  %vm93 = vcmp.gt.f32.partialorder %v77, 0.0
  %vm94 = vcmp.gt.f32.partialorder %v78, 0.0
  %vm95 = vcmp.gt.f32.partialorder %v79, 0.0
  %vm96 = vcmp.gt.f32.partialorder %v80, 0.0
  %vm97 = vcmp.gt.f32.partialorder %v81, 0.0
  %vm98 = vcmp.gt.f32.partialorder %v82, 0.0
  %vm99 = vcmp.gt.f32.partialorder %v83, 0.0
  %vm100 = vcmp.gt.f32.partialorder %v84, 0.0
  %vm101 = vcmp.gt.f32.partialorder %v85, 0.0
  %v102 = vmul.f32 %v70, 0.2
  %v103 = vmul.f32 %v71, 0.2
  %v104 = vmul.f32 %v72, 0.2
  %v105 = vmul.f32 %v73, 0.2
  %v106 = vmul.f32 %v74, 0.2
  %v107 = vmul.f32 %v75, 0.2
  %v108 = vmul.f32 %v76, 0.2
  %v109 = vmul.f32 %v77, 0.2
  %v110 = vmul.f32 %v78, 0.2
  %v111 = vmul.f32 %v79, 0.2
  %v112 = vmul.f32 %v80, 0.2
  %v113 = vmul.f32 %v81, 0.2
  %v114 = vmul.f32 %v82, 0.2
  %v115 = vmul.f32 %v83, 0.2
  %v116 = vmul.f32 %v84, 0.2
  %v117 = vmul.f32 %v85, 0.2
  %v118 = vsel %vm86, %v70, %v102
  %v119 = vsel %vm87, %v71, %v103
  %v120 = vsel %vm88, %v72, %v104
  %v121 = vsel %vm89, %v73, %v105
  %v122 = vsel %vm90, %v74, %v106
  %v123 = vsel %vm91, %v75, %v107
  %v124 = vsel %vm92, %v76, %v108
  %v125 = vsel %vm93, %v77, %v109
  %v126 = vsel %vm94, %v78, %v110
  %v127 = vsel %vm95, %v79, %v111
  %v128 = vsel %vm96, %v80, %v112
  %v129 = vsel %vm97, %v81, %v113
  %v130 = vsel %vm98, %v82, %v114
  %v131 = vsel %vm99, %v83, %v115
  %v132 = vsel %vm100, %v84, %v116
  %v133 = vsel %vm101, %v85, %v117
  %134 = vst [vmem:[%s3] sm:$0xff] %v118
  %135 = vst [vmem:[%s3 + $0x8] sm:$0xff] %v119
  %136 = vst [vmem:[%s3 + $0x10] sm:$0xff] %v120
  %137 = vst [vmem:[%s3 + $0x18] sm:$0xff] %v121
  %138 = vst [vmem:[%s3 + $0x20] sm:$0xff] %v122
  %139 = vst [vmem:[%s3 + $0x28] sm:$0xff] %v123
  %140 = vst [vmem:[%s3 + $0x30] sm:$0xff] %v124
  %141 = vst [vmem:[%s3 + $0x38] sm:$0xff] %v125
  %142 = vst [vmem:[%s3 + $0x40] sm:$0xff] %v126
  %143 = vst [vmem:[%s3 + $0x48] sm:$0xff] %v127
  %144 = vst [vmem:[%s3 + $0x50] sm:$0xff] %v128
  %145 = vst [vmem:[%s3 + $0x58] sm:$0xff] %v129
  %146 = vst [vmem:[%s3 + $0x60] sm:$0xff] %v130
  %147 = vst [vmem:[%s3 + $0x68] sm:$0xff] %v131
  %148 = vst [vmem:[%s3 + $0x70] sm:$0xff] %v132
  %149 = vst [vmem:[%s3 + $0x78] sm:$0xff] %v133
  // Predicated region
  $region14: #{unet_block_forward.3} parent=0 // pred_check
    _
  $region15: #{unet_block_forward.3} parent=0 // pred_check_branch
    %151 = sbr.rel (0) target = $region17
  $region16: #{unet_block_forward.3} parent=0 // pred_region
    _
  $region17: #{unet_block_forward.3} parent=0 // pred_fallthru
    _
  // Predicated region
  $region18: #{unet_block_forward.3} parent=0 // pred_check
    _
  $region19: #{unet_block_forward.3} parent=0 // pred_check_branch
    %153 = sbr.rel (0) target = $region21
  $region20: #{unet_block_forward.3} parent=0 // pred_region
    _
  $region21: #{unet_block_forward.3} parent=0 // pred_fallthru
    _

// kernel: unet_block_forward.2
$region0: #{unet_block_forward.2}
  #allocation0 [shape = 'u32[]', space=smem, size = 0x4, offset = 0x4, fixed_abs, tag = 'smem constant byte address 0x4 - core index']
  #allocation1 [shape = 'u32[72,128]{1,0:T(1,128)}', space=vmem, size = 0x9000, scoped, tag = 'internal scratch']
  %s0 = inlined_call_operand.vmem [shape: bf16[2,9,9,128], index: 0, kind: input, shape index: {}]
  %s1 = inlined_call_operand.vmem [shape: bf16[4,128,128], index: 1, kind: input, shape index: {}]
  %s2 = inlined_call_operand.vmem [shape: bf16[2,64,128], index: 2, kind: output, shape index: {0}]
  %s3 = inlined_call_operand.vmem [shape: f32[2,2,128], index: 3, kind: output, shape index: {1}]
  %4 = xla_tuple %s2, %s3
  %s5 = sld [smem:[#allocation0]]
  $region49: #{unet_block_forward.2} parent=0
    _
  %s7 = ssub.s32 1, %s5
  %s8 = scalar_select 0, %s7, %s5
  loop: start=0, step=1, limit=4
  $region2: #{unet_block_forward.2} parent=0 // loop_pre_header
    _
  $region3: #{unet_block_forward.2} parent=0 // loop_header
    %s10 = sphi 0, %s14
    %p11 = scmp.ge.s32.totalorder %s10, 4
    %s20 = sphi 0, %s22
    %s23 = sphi 0, %s20
    %s24 = sphi 0, %s23
    %s40 = sphi 0, %s24
    %s44 = sphi 0, %s44
    %s46 = sphi 0, %s44
    %s47 = sphi 0, %s46
    %s61 = sphi 0, %s47
    %s67 = sphi 0, %s69
    %s70 = sphi 0, %s67
    %s71 = sphi 0, %s70
    %s87 = sphi 0, %s71
    %s93 = sphi 0, %s95
    %s96 = sphi 0, %s93
    %s97 = sphi 0, %s96
    %s113 = sphi 0, %s97
  $region4: #{unet_block_forward.2} parent=0 // loop_header_branch
    %13 = sbr.rel (%p11) target = $region8
  $region5: #{unet_block_forward.2} parent=0 // loop_body
    %s15 = ssub.s32 %s10, 1
    %s16 = ssub.s32 %s10, 2
    %s17 = sadd.s32 %s10, 1
    %s18 = ssub.s32 %s10, %s17
    %p19 = scmp.eq.s32.totalorder %s18, 0
    %s21 = sadd.s32 %s20, 1
    %s22 = scalar_select %p19, %s20, %s21
    %p25 = pneg %p19
    %p26 = scmp.eq.s32.totalorder %s10, 1
    %p27 = por %p25, %p26
    %p28 = scmp.ne.s32.totalorder %s20, %s23
    %p29 = scmp.eq.s32.totalorder %s10, 0
    %p30 = por %p28, %p29
    %p31 = scmp.ne.s32.totalorder %s20, %s23
    %p32 = scmp.eq.s32.totalorder %s15, 1
    %p33 = por %p31, %p32
    %p34 = scmp.ne.s32.totalorder %s23, %s24
    %p35 = scmp.eq.s32.totalorder %s15, 0
    %p36 = por %p34, %p35
    %p37 = scmp.ne.s32.totalorder %s23, %s24
    %p38 = scmp.eq.s32.totalorder %s16, 1
    %p39 = por %p37, %p38
    %p41 = scmp.ne.s32.totalorder %s24, %s40
    %p42 = scmp.eq.s32.totalorder %s16, 0
    %p43 = por %p41, %p42
    %s45 = sadd.s32 %s44, 1
    %p48 = scmp.eq.s32.totalorder %s10, 1
    %p49 = scmp.ne.s32.totalorder %s44, %s46
    %p50 = scmp.eq.s32.totalorder %s10, 0
    %p51 = por %p49, %p50
    %p52 = scmp.ne.s32.totalorder %s44, %s46
    %p53 = scmp.eq.s32.totalorder %s15, 1
    %p54 = por %p52, %p53
    %p55 = scmp.ne.s32.totalorder %s46, %s47
    %p56 = scmp.eq.s32.totalorder %s15, 0
    %p57 = por %p55, %p56
    %p58 = scmp.ne.s32.totalorder %s46, %s47
    %p59 = scmp.eq.s32.totalorder %s16, 1
    %p60 = por %p58, %p59
    %p62 = scmp.ne.s32.totalorder %s47, %s61
    %p63 = scmp.eq.s32.totalorder %s16, 0
    %p64 = por %p62, %p63
    %s65 = ssub.s32 %s10, %s17
    %p66 = scmp.eq.s32.totalorder %s65, 0
    %s68 = sadd.s32 %s67, 1
    %s69 = scalar_select %p66, %s67, %s68
    %p72 = pneg %p66
    %p73 = scmp.eq.s32.totalorder %s10, 1
    %p74 = por %p72, %p73
    %p75 = scmp.ne.s32.totalorder %s67, %s70
    %p76 = scmp.eq.s32.totalorder %s10, 0
    %p77 = por %p75, %p76
    %p78 = scmp.ne.s32.totalorder %s67, %s70
    %p79 = scmp.eq.s32.totalorder %s15, 1
    %p80 = por %p78, %p79
    %p81 = scmp.ne.s32.totalorder %s70, %s71
    %p82 = scmp.eq.s32.totalorder %s15, 0
    %p83 = por %p81, %p82
    %p84 = scmp.ne.s32.totalorder %s70, %s71
    %p85 = scmp.eq.s32.totalorder %s16, 1
    %p86 = por %p84, %p85
    %p88 = scmp.ne.s32.totalorder %s71, %s87
    %p89 = scmp.eq.s32.totalorder %s16, 0
    %p90 = por %p88, %p89
    %s91 = ssub.s32 %s10, %s17
    %p92 = scmp.eq.s32.totalorder %s91, 0
    %s94 = sadd.s32 %s93, 1
    %s95 = scalar_select %p92, %s93, %s94
    %p98 = pneg %p92
    %p99 = scmp.eq.s32.totalorder %s10, 1
    %p100 = por %p98, %p99
    %p101 = scmp.ne.s32.totalorder %s93, %s96
    %p102 = scmp.eq.s32.totalorder %s10, 0
    %p103 = por %p101, %p102
    %p104 = scmp.ne.s32.totalorder %s93, %s96
    %p105 = scmp.eq.s32.totalorder %s15, 1
    %p106 = por %p104, %p105
    %p107 = scmp.ne.s32.totalorder %s96, %s97
    %p108 = scmp.eq.s32.totalorder %s15, 0
    %p109 = por %p107, %p108
    %p110 = scmp.ne.s32.totalorder %s96, %s97
    %p111 = scmp.eq.s32.totalorder %s16, 1
    %p112 = por %p110, %p111
    %p114 = scmp.ne.s32.totalorder %s97, %s113
    %p115 = scmp.eq.s32.totalorder %s16, 0
    %p116 = por %p114, %p115
    %p117 = scmp.le.s32.totalorder 1, %s10
    %p118 = scmp.lt.s32.totalorder %s10, 3
    %p119 = pnand %p117, %p118
    %p120 = pneg %p119
    // Predicated region
    $region9: #{unet_block_forward.2} parent=5 // pred_check
      _
    $region10: #{unet_block_forward.2} parent=5 // pred_check_branch
      %122 = sbr.rel (%p119) target = $region12
    $region11: #{unet_block_forward.2} parent=5 // pred_region
      %s123 = ssub.s32 %s10, 1
      // Predicated region
      $region13: #{unet_block_forward.2} parent=11 // pred_check
        %p124 = pneg %p57
      $region14: #{unet_block_forward.2} parent=11 // pred_check_branch
        %126 = sbr.rel (%p124) target = $region16
      $region15: #{unet_block_forward.2} parent=11 // pred_region
        _
      $region16: #{unet_block_forward.2} parent=11 // pred_fallthru
        _
    $region12: #{unet_block_forward.2} parent=5 // pred_fallthru
      _
    %p127 = scmp.lt.s32.totalorder %s10, 2
    // Predicated region
    $region17: #{unet_block_forward.2} parent=5 // pred_check
      %p128 = pneg %p127
    $region18: #{unet_block_forward.2} parent=5 // pred_check_branch
      %130 = sbr.rel (%p128) target = $region20
    $region19: #{unet_block_forward.2} parent=5 // pred_region
      // Predicated region
      $region21: #{unet_block_forward.2} parent=19 // pred_check
        %p131 = pneg %p30
      $region22: #{unet_block_forward.2} parent=19 // pred_check_branch
        %133 = sbr.rel (%p131) target = $region24
      $region23: #{unet_block_forward.2} parent=19 // pred_region
        %p134 = scmp.lt.s32.totalorder %s10, 1
        %s135 = scalar_select %p134, %s10, 1
        %s136 = smul.addr %s135, 18
        %s137 = smul.addr %s136, 4
        %s138 = scalar_lea.vmem %s0, %s137
      $region24: #{unet_block_forward.2} parent=19 // pred_fallthru
        _
    $region20: #{unet_block_forward.2} parent=5 // pred_fallthru
      _
    %p139 = scmp.le.s32.totalorder 1, %s10
    %p140 = scmp.lt.s32.totalorder %s10, 3
    %p141 = pnand %p139, %p140
    %p142 = pneg %p141
    // Predicated region
    $region25: #{unet_block_forward.2} parent=5 // pred_check
      _
    $region26: #{unet_block_forward.2} parent=5 // pred_check_branch
      %144 = sbr.rel (%p141) target = $region28
    $region27: #{unet_block_forward.2} parent=5 // pred_region
      %s145 = ssub.s32 %s10, 1
      %p146 = scmp.lt.s32.totalorder %s15, 1
      %s147 = scalar_select %p146, %s15, 1
      %s148 = smul.addr %s147, 18
      %s149 = smul.addr %s148, 4
      %s150 = scalar_lea.vmem %s0, %s149
      %p151 = pneg %p36
      %p152 = pneg %p33
      %p153 = pneg %p57
      %p154 = pneg %p54
      %p155 = pneg %p83
      %p156 = pneg %p80
      %p157 = scmp.lt.s32.totalorder %s15, 1
      %s158 = scalar_select %p157, %s15, 1
      %s159 = smul.addr %s158, 8
      %s160 = smul.addr %s159, 4
      %s161 = scalar_lea.vmem %s2, %s160
      %p162 = pneg %p109
      %p163 = pneg %p106
      %p164 = scmp.lt.s32.totalorder %s15, 1
      %s165 = scalar_select %p164, %s15, 1
      %s166 = smul.addr %s165, 2
      %s167 = scalar_lea.vmem %s3, %s166
      %p168 = scmp.lt.s32.totalorder %s15, 1
      %s169 = scalar_select %p168, %s15, 1
      %s170 = smul.addr %s169, 18
      %s171 = smul.addr %s170, 4
      %s172 = scalar_lea.vmem %s0, %s171
      %p173 = scmp.lt.s32.totalorder %s15, 1
      %s174 = scalar_select %p173, %s15, 1
      %s175 = smul.addr %s174, 8
      %s176 = smul.addr %s175, 4
      %s177 = scalar_lea.vmem %s2, %s176
      %p178 = scmp.lt.s32.totalorder %s15, 1
      %s179 = scalar_select %p178, %s15, 1
      %s180 = smul.addr %s179, 2
      %s181 = scalar_lea.vmem %s3, %s180
      %v182 = vld [vmem:[%s172] sm:$0xf]
      %v183 = vld [vmem:[%s172 + $0x8] sm:$0xf]
      %v184 = vld [vmem:[%s172 + $0x10] sm:$0xf]
      %v185 = vld [vmem:[%s172 + $0x18] sm:$0xf]
      %v186 = vld [vmem:[%s172 + $0x20] sm:$0xf]
      %v187 = vld [vmem:[%s172 + $0x28] sm:$0xf]
      %v188 = vld [vmem:[%s172 + $0x30] sm:$0xf]
      %v189 = vld [vmem:[%s172 + $0x38] sm:$0xf]
      %v190 = vld [vmem:[%s1] sm:$0xf]
      %v191 = vld [vmem:[%s1 + $0x4] sm:$0xf]
      %v192 = vld [vmem:[%s1 + $0x8] sm:$0xf]
      %v193 = vld [vmem:[%s1 + $0xc] sm:$0xf]
      %v194 = vld [vmem:[%s1 + $0x10] sm:$0xf]
      %v195 = vld [vmem:[%s1 + $0x14] sm:$0xf]
      %v196 = vld [vmem:[%s1 + $0x18] sm:$0xf]
      %v197 = vld [vmem:[%s1 + $0x1c] sm:$0xf]
      %v198 = vld [vmem:[%s1 + $0x20] sm:$0xf]
      %v199 = vld [vmem:[%s1 + $0x24] sm:$0xf]
      %v200 = vld [vmem:[%s1 + $0x28] sm:$0xf]
      %v201 = vld [vmem:[%s1 + $0x2c] sm:$0xf]
      %v202 = vld [vmem:[%s1 + $0x30] sm:$0xf]
      %v203 = vld [vmem:[%s1 + $0x34] sm:$0xf]
      %v204 = vld [vmem:[%s1 + $0x38] sm:$0xf]
      %v205 = vld [vmem:[%s1 + $0x3c] sm:$0xf]
      %v206 = vld [vmem:[%s172 + $0x4] sm:$0x1]
      %v207 = vld [vmem:[%s172 + $0xc] sm:$0x1]
      %v208 = vld [vmem:[%s172 + $0x14] sm:$0x1]
      %v209 = vld [vmem:[%s172 + $0x1c] sm:$0x1]
      %v210 = vld [vmem:[%s172 + $0x24] sm:$0x1]
      %v211 = vld [vmem:[%s172 + $0x2c] sm:$0x1]
      %v212 = vld [vmem:[%s172 + $0x34] sm:$0x1]
      %v213 = vld [vmem:[%s172 + $0x3c] sm:$0x1]
      %vm214 = vsmask.f32 3328
      %vm215 = vsmask.f32 7440
      %vm216 = vmor %vm214, %vm215
      %v218 = vshrl.u32 %v182, 16
      %v220 = vrot.slane %v218, 4
      %v221 = vshll.u32 %v182, 16
      %v223 = vrot.slane %v221, 5
      %v224 = vor.u32 %v220, %v223
      %v225 = vrot.slane %v224, 4
      %v227 = vshll.u32 %v206, 16
      %v229 = vrot.slane %v227, 5
      %v230 = vsel %vm216, %v225, %v229
      %v232 = vshrl.u32 %v183, 16
      %v234 = vrot.slane %v232, 4
      %v235 = vshll.u32 %v183, 16
      %v237 = vrot.slane %v235, 5
      %v238 = vor.u32 %v234, %v237
      %v239 = vrot.slane %v238, 4
      %v241 = vshll.u32 %v207, 16
      %v243 = vrot.slane %v241, 5
      %v244 = vsel %vm216, %v239, %v243
      %v246 = vshrl.u32 %v184, 16
      %v248 = vrot.slane %v246, 4
      %v249 = vshll.u32 %v184, 16
      %v251 = vrot.slane %v249, 5
      %v252 = vor.u32 %v248, %v251
      %v253 = vrot.slane %v252, 4
      %v255 = vshll.u32 %v208, 16
      %v257 = vrot.slane %v255, 5
      %v258 = vsel %vm216, %v253, %v257
      %v260 = vshrl.u32 %v185, 16
      %v262 = vrot.slane %v260, 4
      %v263 = vshll.u32 %v185, 16
      %v265 = vrot.slane %v263, 5
      %v266 = vor.u32 %v262, %v265
      %v267 = vrot.slane %v266, 4
      %v269 = vshll.u32 %v209, 16
      %v271 = vrot.slane %v269, 5
      %v272 = vsel %vm216, %v267, %v271
      %v274 = vshrl.u32 %v186, 16
      %v276 = vrot.slane %v274, 4
      %v277 = vshll.u32 %v186, 16
      %v279 = vrot.slane %v277, 5
      %v280 = vor.u32 %v276, %v279
      %v281 = vrot.slane %v280, 4
      %v283 = vshll.u32 %v210, 16
      %v285 = vrot.slane %v283, 5
      %v286 = vsel %vm216, %v281, %v285
      %v288 = vshrl.u32 %v187, 16
      %v290 = vrot.slane %v288, 4
      %v291 = vshll.u32 %v187, 16
      %v293 = vrot.slane %v291, 5
      %v294 = vor.u32 %v290, %v293
      %v295 = vrot.slane %v294, 4
      %v297 = vshll.u32 %v211, 16
      %v299 = vrot.slane %v297, 5
      %v300 = vsel %vm216, %v295, %v299
      %v302 = vshrl.u32 %v188, 16
      %v304 = vrot.slane %v302, 4
      %v305 = vshll.u32 %v188, 16
      %v307 = vrot.slane %v305, 5
      %v308 = vor.u32 %v304, %v307
      %v309 = vrot.slane %v308, 4
      %v311 = vshll.u32 %v212, 16
      %v313 = vrot.slane %v311, 5
      %v314 = vsel %vm216, %v309, %v313
      %v316 = vshrl.u32 %v189, 16
      %v318 = vrot.slane %v316, 4
      %v319 = vshll.u32 %v189, 16
      %v321 = vrot.slane %v319, 5
      %v322 = vor.u32 %v318, %v321
      %v323 = vrot.slane %v322, 4
      %v325 = vshll.u32 %v213, 16
      %v327 = vrot.slane %v325, 5
      %v328 = vsel %vm216, %v323, %v327
      %s329 = scalar_lea.vmem %s1, 64
      %v330 = vld [vmem:[%s329] sm:$0xf]
      %v331 = vld [vmem:[%s329 + $0x4] sm:$0xf]
      %v332 = vld [vmem:[%s329 + $0x8] sm:$0xf]
      %v333 = vld [vmem:[%s329 + $0xc] sm:$0xf]
      %v334 = vld [vmem:[%s329 + $0x10] sm:$0xf]
      %v335 = vld [vmem:[%s329 + $0x14] sm:$0xf]
      %v336 = vld [vmem:[%s329 + $0x18] sm:$0xf]
      %v337 = vld [vmem:[%s329 + $0x1c] sm:$0xf]
      %v338 = vld [vmem:[%s329 + $0x20] sm:$0xf]
      %v339 = vld [vmem:[%s329 + $0x24] sm:$0xf]
      %v340 = vld [vmem:[%s329 + $0x28] sm:$0xf]
      %v341 = vld [vmem:[%s329 + $0x2c] sm:$0xf]
      %v342 = vld [vmem:[%s329 + $0x30] sm:$0xf]
      %v343 = vld [vmem:[%s329 + $0x34] sm:$0xf]
      %v344 = vld [vmem:[%s329 + $0x38] sm:$0xf]
      %v345 = vld [vmem:[%s329 + $0x3c] sm:$0xf]
      %v346 = vunpack.c.l.b16 %v230
      %v347 = vunpack.c.l.b16 %v244
      %v348 = vunpack.c.l.b16 %v258
      %v349 = vunpack.c.l.b16 %v272
      %v350 = vunpack.c.l.b16 %v286
      %v351 = vunpack.c.l.b16 %v300
      %v352 = vunpack.c.l.b16 %v314
      %v353 = vunpack.c.l.b16 %v328
      %v354 = vpack.c.b16 %v347, %v346
      %v355 = vpack.c.b16 %v349, %v348
      %v356 = vpack.c.b16 %v351, %v350
      %v357 = vpack.c.b16 %v353, %v352
      %v378 = vunpack.c.l.b16 %v330
      %v379 = vunpack.c.l.b16 %v331
      %v380 = vunpack.c.l.b16 %v332
      %v381 = vunpack.c.l.b16 %v333
      %v382 = vunpack.c.l.b16 %v334
      %v383 = vunpack.c.l.b16 %v335
      %v384 = vunpack.c.l.b16 %v336
      %v385 = vunpack.c.l.b16 %v337
      %v386 = vunpack.c.l.b16 %v338
      %v387 = vunpack.c.l.b16 %v339
      %v388 = vunpack.c.l.b16 %v340
      %v389 = vunpack.c.l.b16 %v341
      %v390 = vunpack.c.l.b16 %v342
      %v391 = vunpack.c.l.b16 %v343
      %v392 = vunpack.c.l.b16 %v344
      %v393 = vunpack.c.l.b16 %v345
      %v394 = vpack.c.b16 %v379, %v378
      %v395 = vpack.c.b16 %v381, %v380
      %v396 = vpack.c.b16 %v383, %v382
      %v397 = vpack.c.b16 %v385, %v384
      %v398 = vpack.c.b16 %v387, %v386
      %v399 = vpack.c.b16 %v389, %v388
      %v400 = vpack.c.b16 %v391, %v390
      %v401 = vpack.c.b16 %v393, %v392
      %410 = vmatpush.bf16.msra.mxu0 %v401
      %411 = vmatpush.bf16.msra.mxu0 %v400
      %412 = vmatpush.bf16.msra.mxu0 %v399
      %413 = vmatpush.bf16.msra.mxu0 %v398
      %414 = vmatpush.bf16.msra.mxu0 %v397
      %415 = vmatpush.bf16.msra.mxu0 %v396
      %416 = vmatpush.bf16.msra.mxu0 %v395
      %417 = vmatpush.bf16.msra.mxu0 %v394
      %418 = vmatmul.bf16.gmra.mxu0 %v354
      %v419 = vpop.f32.mrf.mxu0
      %v420 = vadd.f32 0.0, %v419
      %v421 = vpop.f32.mrf.mxu0
      %v422 = vadd.f32 0.0, %v421
      %423 = vmatmul.bf16.gmra.mxu0 %v355
      %v424 = vpop.f32.mrf.mxu0
      %v425 = vadd.f32 0.0, %v424
      %v426 = vpop.f32.mrf.mxu0
      %v427 = vadd.f32 0.0, %v426
      %428 = vmatmul.bf16.gmra.mxu0 %v356
      %v429 = vpop.f32.mrf.mxu0
      %v430 = vadd.f32 0.0, %v429
      %v431 = vpop.f32.mrf.mxu0
      %v432 = vadd.f32 0.0, %v431
      %433 = vmatmul.bf16.gmra.mxu0 %v357
      %v434 = vpop.f32.mrf.mxu0
      %v435 = vadd.f32 0.0, %v434
      %v436 = vpop.f32.mrf.mxu0
      %v437 = vadd.f32 0.0, %v436
      %438 = vdwg.mxu0
      %v447 = vunpack.c.l.b16 %v182
      %v448 = vunpack.c.l.b16 %v183
      %v449 = vunpack.c.l.b16 %v184
      %v450 = vunpack.c.l.b16 %v185
      %v451 = vunpack.c.l.b16 %v186
      %v452 = vunpack.c.l.b16 %v187
      %v453 = vunpack.c.l.b16 %v188
      %v454 = vunpack.c.l.b16 %v189
      %v455 = vpack.c.b16 %v448, %v447
      %v456 = vpack.c.b16 %v450, %v449
      %v457 = vpack.c.b16 %v452, %v451
      %v458 = vpack.c.b16 %v454, %v453
      %v479 = vunpack.c.l.b16 %v190
      %v480 = vunpack.c.l.b16 %v191
      %v481 = vunpack.c.l.b16 %v192
      %v482 = vunpack.c.l.b16 %v193
      %v483 = vunpack.c.l.b16 %v194
      %v484 = vunpack.c.l.b16 %v195
      %v485 = vunpack.c.l.b16 %v196
      %v486 = vunpack.c.l.b16 %v197
      %v487 = vunpack.c.l.b16 %v198
      %v488 = vunpack.c.l.b16 %v199
      %v489 = vunpack.c.l.b16 %v200
      %v490 = vunpack.c.l.b16 %v201
      %v491 = vunpack.c.l.b16 %v202
      %v492 = vunpack.c.l.b16 %v203
      %v493 = vunpack.c.l.b16 %v204
      %v494 = vunpack.c.l.b16 %v205
      %v495 = vpack.c.b16 %v480, %v479
      %v496 = vpack.c.b16 %v482, %v481
      %v497 = vpack.c.b16 %v484, %v483
      %v498 = vpack.c.b16 %v486, %v485
      %v499 = vpack.c.b16 %v488, %v487
      %v500 = vpack.c.b16 %v490, %v489
      %v501 = vpack.c.b16 %v492, %v491
      %v502 = vpack.c.b16 %v494, %v493
      %511 = vmatpush.bf16.msra.mxu0 %v502
      %512 = vmatpush.bf16.msra.mxu0 %v501
      %513 = vmatpush.bf16.msra.mxu0 %v500
      %514 = vmatpush.bf16.msra.mxu0 %v499
      %515 = vmatpush.bf16.msra.mxu0 %v498
      %516 = vmatpush.bf16.msra.mxu0 %v497
      %517 = vmatpush.bf16.msra.mxu0 %v496
      %518 = vmatpush.bf16.msra.mxu0 %v495
      %519 = vmatmul.bf16.gmra.mxu0 %v455
      %v520 = vpop.f32.mrf.mxu0
      %v521 = vadd.f32 %v420, %v520
      %v522 = vpop.f32.mrf.mxu0
      %v523 = vadd.f32 %v422, %v522
      %524 = vmatmul.bf16.gmra.mxu0 %v456
      %v525 = vpop.f32.mrf.mxu0
      %v526 = vadd.f32 %v425, %v525
      %v527 = vpop.f32.mrf.mxu0
      %v528 = vadd.f32 %v427, %v527
      %529 = vmatmul.bf16.gmra.mxu0 %v457
      %v530 = vpop.f32.mrf.mxu0
      %v531 = vadd.f32 %v430, %v530
      %v532 = vpop.f32.mrf.mxu0
      %v533 = vadd.f32 %v432, %v532
      %534 = vmatmul.bf16.gmra.mxu0 %v458
      %v535 = vpop.f32.mrf.mxu0
      %v536 = vadd.f32 %v435, %v535
      %v537 = vpop.f32.mrf.mxu0
      %v538 = vadd.f32 %v437, %v537
      %539 = vdwg.mxu0
      %s540 = scalar_lea.vmem %s172, 8
      %v541 = vld [vmem:[%s540] sm:$0xf]
      %v542 = vld [vmem:[%s540 + $0x8] sm:$0xf]
      %v543 = vld [vmem:[%s540 + $0x10] sm:$0xf]
      %v544 = vld [vmem:[%s540 + $0x18] sm:$0xf]
      %v545 = vld [vmem:[%s540 + $0x20] sm:$0xf]
      %v546 = vld [vmem:[%s540 + $0x28] sm:$0xf]
      %v547 = vld [vmem:[%s540 + $0x30] sm:$0xf]
      %v548 = vld [vmem:[%s540 + $0x38] sm:$0xf]
      %s549 = scalar_lea.vmem %s1, 128
      %v550 = vld [vmem:[%s549] sm:$0xf]
      %v551 = vld [vmem:[%s549 + $0x4] sm:$0xf]
      %v552 = vld [vmem:[%s549 + $0x8] sm:$0xf]
      %v553 = vld [vmem:[%s549 + $0xc] sm:$0xf]
      %v554 = vld [vmem:[%s549 + $0x10] sm:$0xf]
      %v555 = vld [vmem:[%s549 + $0x14] sm:$0xf]
      %v556 = vld [vmem:[%s549 + $0x18] sm:$0xf]
      %v557 = vld [vmem:[%s549 + $0x1c] sm:$0xf]
      %v558 = vld [vmem:[%s549 + $0x20] sm:$0xf]
      %v559 = vld [vmem:[%s549 + $0x24] sm:$0xf]
      %v560 = vld [vmem:[%s549 + $0x28] sm:$0xf]
      %v561 = vld [vmem:[%s549 + $0x2c] sm:$0xf]
      %v562 = vld [vmem:[%s549 + $0x30] sm:$0xf]
      %v563 = vld [vmem:[%s549 + $0x34] sm:$0xf]
      %v564 = vld [vmem:[%s549 + $0x38] sm:$0xf]
      %v565 = vld [vmem:[%s549 + $0x3c] sm:$0xf]
      %v574 = vunpack.c.l.b16 %v541
      %v575 = vunpack.c.l.b16 %v542
      %v576 = vunpack.c.l.b16 %v543
      %v577 = vunpack.c.l.b16 %v544
      %v578 = vunpack.c.l.b16 %v545
      %v579 = vunpack.c.l.b16 %v546
      %v580 = vunpack.c.l.b16 %v547
      %v581 = vunpack.c.l.b16 %v548
      %v582 = vpack.c.b16 %v575, %v574
      %v583 = vpack.c.b16 %v577, %v576
      %v584 = vpack.c.b16 %v579, %v578
      %v585 = vpack.c.b16 %v581, %v580
      %v606 = vunpack.c.l.b16 %v550
      %v607 = vunpack.c.l.b16 %v551
      %v608 = vunpack.c.l.b16 %v552
      %v609 = vunpack.c.l.b16 %v553
      %v610 = vunpack.c.l.b16 %v554
      %v611 = vunpack.c.l.b16 %v555
      %v612 = vunpack.c.l.b16 %v556
      %v613 = vunpack.c.l.b16 %v557
      %v614 = vunpack.c.l.b16 %v558
      %v615 = vunpack.c.l.b16 %v559
      %v616 = vunpack.c.l.b16 %v560
      %v617 = vunpack.c.l.b16 %v561
      %v618 = vunpack.c.l.b16 %v562
      %v619 = vunpack.c.l.b16 %v563
      %v620 = vunpack.c.l.b16 %v564
      %v621 = vunpack.c.l.b16 %v565
      %v622 = vpack.c.b16 %v607, %v606
      %v623 = vpack.c.b16 %v609, %v608
      %v624 = vpack.c.b16 %v611, %v610
      %v625 = vpack.c.b16 %v613, %v612
      %v626 = vpack.c.b16 %v615, %v614
      %v627 = vpack.c.b16 %v617, %v616
      %v628 = vpack.c.b16 %v619, %v618
      %v629 = vpack.c.b16 %v621, %v620
      %638 = vmatpush.bf16.msra.mxu0 %v629
      %639 = vmatpush.bf16.msra.mxu0 %v628
      %640 = vmatpush.bf16.msra.mxu0 %v627
      %641 = vmatpush.bf16.msra.mxu0 %v626
      %642 = vmatpush.bf16.msra.mxu0 %v625
      %643 = vmatpush.bf16.msra.mxu0 %v624
      %644 = vmatpush.bf16.msra.mxu0 %v623
      %645 = vmatpush.bf16.msra.mxu0 %v622
      %646 = vmatmul.bf16.gmra.mxu0 %v582
      %v647 = vpop.f32.mrf.mxu0
      %v648 = vadd.f32 0.0, %v647
      %v649 = vpop.f32.mrf.mxu0
      %v650 = vadd.f32 0.0, %v649
      %651 = vmatmul.bf16.gmra.mxu0 %v583
      %v652 = vpop.f32.mrf.mxu0
      %v653 = vadd.f32 0.0, %v652
      %v654 = vpop.f32.mrf.mxu0
      %v655 = vadd.f32 0.0, %v654
      %656 = vmatmul.bf16.gmra.mxu0 %v584
      %v657 = vpop.f32.mrf.mxu0
      %v658 = vadd.f32 0.0, %v657
      %v659 = vpop.f32.mrf.mxu0
      %v660 = vadd.f32 0.0, %v659
      %661 = vmatmul.bf16.gmra.mxu0 %v585
      %v662 = vpop.f32.mrf.mxu0
      %v663 = vadd.f32 0.0, %v662
      %v664 = vpop.f32.mrf.mxu0
      %v665 = vadd.f32 0.0, %v664
      %666 = vdwg.mxu0
      %v667 = vadd.f32 %v521, %v648
      %v668 = vadd.f32 %v523, %v650
      %v669 = vadd.f32 %v526, %v653
      %v670 = vadd.f32 %v528, %v655
      %v671 = vadd.f32 %v531, %v658
      %v672 = vadd.f32 %v533, %v660
      %v673 = vadd.f32 %v536, %v663
      %v674 = vadd.f32 %v538, %v665
      %v675 = vld [vmem:[%s540] sm:$0xf]
      %v676 = vld [vmem:[%s540 + $0x4] sm:$0x1]
      %v677 = vld [vmem:[%s540 + $0x8] sm:$0xf]
      %v678 = vld [vmem:[%s540 + $0xc] sm:$0x1]
      %v679 = vld [vmem:[%s540 + $0x10] sm:$0xf]
      %v680 = vld [vmem:[%s540 + $0x14] sm:$0x1]
      %v681 = vld [vmem:[%s540 + $0x18] sm:$0xf]
      %v682 = vld [vmem:[%s540 + $0x1c] sm:$0x1]
      %v683 = vld [vmem:[%s540 + $0x20] sm:$0xf]
      %v684 = vld [vmem:[%s540 + $0x24] sm:$0x1]
      %v685 = vld [vmem:[%s540 + $0x28] sm:$0xf]
      %v686 = vld [vmem:[%s540 + $0x2c] sm:$0x1]
      %v687 = vld [vmem:[%s540 + $0x30] sm:$0xf]
      %v688 = vld [vmem:[%s540 + $0x34] sm:$0x1]
      %v689 = vld [vmem:[%s540 + $0x38] sm:$0xf]
      %v690 = vld [vmem:[%s540 + $0x3c] sm:$0x1]
      %v692 = vshrl.u32 %v675, 16
      %v694 = vrot.slane %v692, 4
      %v695 = vshll.u32 %v675, 16
      %v697 = vrot.slane %v695, 5
      %v698 = vor.u32 %v694, %v697
      %v699 = vrot.slane %v698, 4
      %v701 = vshll.u32 %v676, 16
      %v703 = vrot.slane %v701, 5
      %v704 = vsel %vm216, %v699, %v703
      %v706 = vshrl.u32 %v677, 16
      %v708 = vrot.slane %v706, 4
      %v709 = vshll.u32 %v677, 16
      %v711 = vrot.slane %v709, 5
      %v712 = vor.u32 %v708, %v711
      %v713 = vrot.slane %v712, 4
      %v715 = vshll.u32 %v678, 16
      %v717 = vrot.slane %v715, 5
      %v718 = vsel %vm216, %v713, %v717
      %v720 = vshrl.u32 %v679, 16
      %v722 = vrot.slane %v720, 4
      %v723 = vshll.u32 %v679, 16
      %v725 = vrot.slane %v723, 5
      %v726 = vor.u32 %v722, %v725
      %v727 = vrot.slane %v726, 4
      %v729 = vshll.u32 %v680, 16
      %v731 = vrot.slane %v729, 5
      %v732 = vsel %vm216, %v727, %v731
      %v734 = vshrl.u32 %v681, 16
      %v736 = vrot.slane %v734, 4
      %v737 = vshll.u32 %v681, 16
      %v739 = vrot.slane %v737, 5
      %v740 = vor.u32 %v736, %v739
      %v741 = vrot.slane %v740, 4
      %v743 = vshll.u32 %v682, 16
      %v745 = vrot.slane %v743, 5
      %v746 = vsel %vm216, %v741, %v745
      %v748 = vshrl.u32 %v683, 16
      %v750 = vrot.slane %v748, 4
      %v751 = vshll.u32 %v683, 16
      %v753 = vrot.slane %v751, 5
      %v754 = vor.u32 %v750, %v753
      %v755 = vrot.slane %v754, 4
      %v757 = vshll.u32 %v684, 16
      %v759 = vrot.slane %v757, 5
      %v760 = vsel %vm216, %v755, %v759
      %v762 = vshrl.u32 %v685, 16
      %v764 = vrot.slane %v762, 4
      %v765 = vshll.u32 %v685, 16
      %v767 = vrot.slane %v765, 5
      %v768 = vor.u32 %v764, %v767
      %v769 = vrot.slane %v768, 4
      %v771 = vshll.u32 %v686, 16
      %v773 = vrot.slane %v771, 5
      %v774 = vsel %vm216, %v769, %v773
      %v776 = vshrl.u32 %v687, 16
      %v778 = vrot.slane %v776, 4
      %v779 = vshll.u32 %v687, 16
      %v781 = vrot.slane %v779, 5
      %v782 = vor.u32 %v778, %v781
      %v783 = vrot.slane %v782, 4
      %v785 = vshll.u32 %v688, 16
      %v787 = vrot.slane %v785, 5
      %v788 = vsel %vm216, %v783, %v787
      %v790 = vshrl.u32 %v689, 16
      %v792 = vrot.slane %v790, 4
      %v793 = vshll.u32 %v689, 16
      %v795 = vrot.slane %v793, 5
      %v796 = vor.u32 %v792, %v795
      %v797 = vrot.slane %v796, 4
      %v799 = vshll.u32 %v690, 16
      %v801 = vrot.slane %v799, 5
      %v802 = vsel %vm216, %v797, %v801
      %s803 = scalar_lea.vmem %s1, 192
      %v804 = vld [vmem:[%s803] sm:$0xf]
      %v805 = vld [vmem:[%s803 + $0x4] sm:$0xf]
      %v806 = vld [vmem:[%s803 + $0x8] sm:$0xf]
      %v807 = vld [vmem:[%s803 + $0xc] sm:$0xf]
      %v808 = vld [vmem:[%s803 + $0x10] sm:$0xf]
      %v809 = vld [vmem:[%s803 + $0x14] sm:$0xf]
      %v810 = vld [vmem:[%s803 + $0x18] sm:$0xf]
      %v811 = vld [vmem:[%s803 + $0x1c] sm:$0xf]
      %v812 = vld [vmem:[%s803 + $0x20] sm:$0xf]
      %v813 = vld [vmem:[%s803 + $0x24] sm:$0xf]
      %v814 = vld [vmem:[%s803 + $0x28] sm:$0xf]
      %v815 = vld [vmem:[%s803 + $0x2c] sm:$0xf]
      %v816 = vld [vmem:[%s803 + $0x30] sm:$0xf]
      %v817 = vld [vmem:[%s803 + $0x34] sm:$0xf]
      %v818 = vld [vmem:[%s803 + $0x38] sm:$0xf]
      %v819 = vld [vmem:[%s803 + $0x3c] sm:$0xf]
      %v820 = vunpack.c.l.b16 %v704
      %v821 = vunpack.c.l.b16 %v718
      %v822 = vunpack.c.l.b16 %v732
      %v823 = vunpack.c.l.b16 %v746
      %v824 = vunpack.c.l.b16 %v760
      %v825 = vunpack.c.l.b16 %v774
      %v826 = vunpack.c.l.b16 %v788
      %v827 = vunpack.c.l.b16 %v802
      %v828 = vpack.c.b16 %v821, %v820
      %v829 = vpack.c.b16 %v823, %v822
      %v830 = vpack.c.b16 %v825, %v824
      %v831 = vpack.c.b16 %v827, %v826
      %v852 = vunpack.c.l.b16 %v804
      %v853 = vunpack.c.l.b16 %v805
      %v854 = vunpack.c.l.b16 %v806
      %v855 = vunpack.c.l.b16 %v807
      %v856 = vunpack.c.l.b16 %v808
      %v857 = vunpack.c.l.b16 %v809
      %v858 = vunpack.c.l.b16 %v810
      %v859 = vunpack.c.l.b16 %v811
      %v860 = vunpack.c.l.b16 %v812
      %v861 = vunpack.c.l.b16 %v813
      %v862 = vunpack.c.l.b16 %v814
      %v863 = vunpack.c.l.b16 %v815
      %v864 = vunpack.c.l.b16 %v816
      %v865 = vunpack.c.l.b16 %v817
      %v866 = vunpack.c.l.b16 %v818
      %v867 = vunpack.c.l.b16 %v819
      %v868 = vpack.c.b16 %v853, %v852
      %v869 = vpack.c.b16 %v855, %v854
      %v870 = vpack.c.b16 %v857, %v856
      %v871 = vpack.c.b16 %v859, %v858
      %v872 = vpack.c.b16 %v861, %v860
      %v873 = vpack.c.b16 %v863, %v862
      %v874 = vpack.c.b16 %v865, %v864
      %v875 = vpack.c.b16 %v867, %v866
      %884 = vmatpush.bf16.msra.mxu0 %v875
      %885 = vmatpush.bf16.msra.mxu0 %v874
      %886 = vmatpush.bf16.msra.mxu0 %v873
      %887 = vmatpush.bf16.msra.mxu0 %v872
      %888 = vmatpush.bf16.msra.mxu0 %v871
      %889 = vmatpush.bf16.msra.mxu0 %v870
      %890 = vmatpush.bf16.msra.mxu0 %v869
      %891 = vmatpush.bf16.msra.mxu0 %v868
      %892 = vmatmul.bf16.gmra.mxu0 %v828
      %v893 = vpop.f32.mrf.mxu0
      %v894 = vadd.f32 0.0, %v893
      %v895 = vpop.f32.mrf.mxu0
      %v896 = vadd.f32 0.0, %v895
      %897 = vmatmul.bf16.gmra.mxu0 %v829
      %v898 = vpop.f32.mrf.mxu0
      %v899 = vadd.f32 0.0, %v898
      %v900 = vpop.f32.mrf.mxu0
      %v901 = vadd.f32 0.0, %v900
      %902 = vmatmul.bf16.gmra.mxu0 %v830
      %v903 = vpop.f32.mrf.mxu0
      %v904 = vadd.f32 0.0, %v903
      %v905 = vpop.f32.mrf.mxu0
      %v906 = vadd.f32 0.0, %v905
      %907 = vmatmul.bf16.gmra.mxu0 %v831
      %v908 = vpop.f32.mrf.mxu0
      %v909 = vadd.f32 0.0, %v908
      %v910 = vpop.f32.mrf.mxu0
      %v911 = vadd.f32 0.0, %v910
      %912 = vdwg.mxu0
      %v913 = vadd.f32 %v667, %v894
      %v914 = vadd.f32 %v668, %v896
      %v915 = vadd.f32 %v669, %v899
      %v916 = vadd.f32 %v670, %v901
      %v917 = vadd.f32 %v671, %v904
      %v918 = vadd.f32 %v672, %v906
      %v919 = vadd.f32 %v673, %v909
      %v920 = vadd.f32 %v674, %v911
      %v921 = vpack.c.bf16 %v913, %v913
      %v922 = vpack.c.bf16 %v914, %v914
      %v923 = vpack.c.bf16 %v915, %v915
      %v924 = vpack.c.bf16 %v916, %v916
      %v925 = vpack.c.bf16 %v917, %v917
      %v926 = vpack.c.bf16 %v918, %v918
      %v927 = vpack.c.bf16 %v919, %v919
      %v928 = vpack.c.bf16 %v920, %v920
      %929 = vst [vmem:[%s177] sm:$0xf] %v921
      %930 = vst [vmem:[%s177 + $0x4] sm:$0xf] %v922
      %931 = vst [vmem:[%s177 + $0x8] sm:$0xf] %v923
      %932 = vst [vmem:[%s177 + $0xc] sm:$0xf] %v924
      %933 = vst [vmem:[%s177 + $0x10] sm:$0xf] %v925
      %934 = vst [vmem:[%s177 + $0x14] sm:$0xf] %v926
      %935 = vst [vmem:[%s177 + $0x18] sm:$0xf] %v927
      %936 = vst [vmem:[%s177 + $0x1c] sm:$0xf] %v928
      %v937 = vadd.f32 %v913, %v914
      %v938 = vadd.f32 %v937, %v915
      %v939 = vadd.f32 %v938, %v916
      %v940 = vadd.f32 %v939, %v917
      %v941 = vadd.f32 %v940, %v918
      %v942 = vadd.f32 %v941, %v919
      %v943 = vadd.f32 %v942, %v920
      %v944 = vrot.slane %v943, 4
      %v945 = vadd.f32 %v943, %v944
      %v946 = vrot.slane %v945, 2
      %v947 = vadd.f32 %v945, %v946
      %v948 = vrot.slane %v947, 1
      %v949 = vadd.f32 %v947, %v948
      %v950 = vmul.f32 %v949, 0.015625
      %v951 = vsub.f32 %v913, %v950
      %v952 = vsub.f32 %v914, %v950
      %v953 = vsub.f32 %v915, %v950
      %v954 = vsub.f32 %v916, %v950
      %v955 = vsub.f32 %v917, %v950
      %v956 = vsub.f32 %v918, %v950
      %v957 = vsub.f32 %v919, %v950
      %v958 = vsub.f32 %v920, %v950
      %v959 = vmul.f32 %v951, %v951
      %v960 = vmul.f32 %v952, %v952
      %v961 = vmul.f32 %v953, %v953
      %v962 = vmul.f32 %v954, %v954
      %v963 = vmul.f32 %v955, %v955
      %v964 = vmul.f32 %v956, %v956
      %v965 = vmul.f32 %v957, %v957
      %v966 = vmul.f32 %v958, %v958
      %v967 = vadd.f32 %v959, %v960
      %v968 = vadd.f32 %v967, %v961
      %v969 = vadd.f32 %v968, %v962
      %v970 = vadd.f32 %v969, %v963
      %v971 = vadd.f32 %v970, %v964
      %v972 = vadd.f32 %v971, %v965
      %v973 = vadd.f32 %v972, %v966
      %v974 = vrot.slane %v973, 4
      %v975 = vadd.f32 %v973, %v974
      %v976 = vrot.slane %v975, 2
      %v977 = vadd.f32 %v975, %v976
      %v978 = vrot.slane %v977, 1
      %v979 = vadd.f32 %v977, %v978
      %980 = vst [vmem:[%s181] sm:$0x1] %v949
      %981 = vst [vmem:[%s181 + $0x1] sm:$0x1] %v979
      %p982 = scmp.lt.s32.totalorder %s15, 1
      %s983 = scalar_select %p982, %s15, 1
      %s984 = smul.addr %s983, 8
      %s985 = smul.addr %s984, 4
      %s986 = scalar_lea.vmem %s2, %s985
      %p987 = scmp.lt.s32.totalorder %s15, 1
      %s988 = scalar_select %p987, %s15, 1
      %s989 = smul.addr %s988, 2
      %s990 = scalar_lea.vmem %s3, %s989
      // Predicated region
      $region29: #{unet_block_forward.2} parent=27 // pred_check
        %p991 = pneg %p80
      $region30: #{unet_block_forward.2} parent=27 // pred_check_branch
        %993 = sbr.rel (%p991) target = $region32
      $region31: #{unet_block_forward.2} parent=27 // pred_region
        _
      $region32: #{unet_block_forward.2} parent=27 // pred_fallthru
        _
      // Predicated region
      $region33: #{unet_block_forward.2} parent=27 // pred_check
        %p994 = pneg %p106
      $region34: #{unet_block_forward.2} parent=27 // pred_check_branch
        %996 = sbr.rel (%p994) target = $region36
      $region35: #{unet_block_forward.2} parent=27 // pred_region
        _
      $region36: #{unet_block_forward.2} parent=27 // pred_fallthru
        _
    $region28: #{unet_block_forward.2} parent=5 // pred_fallthru
      _
    %p997 = scmp.le.s32.totalorder 2, %s10
    // Predicated region
    $region37: #{unet_block_forward.2} parent=5 // pred_check
      %p998 = pneg %p997
    $region38: #{unet_block_forward.2} parent=5 // pred_check_branch
      %1000 = sbr.rel (%p998) target = $region40
    $region39: #{unet_block_forward.2} parent=5 // pred_region
      %s1001 = ssub.s32 %s10, 2
      // Predicated region
      $region41: #{unet_block_forward.2} parent=39 // pred_check
        %p1002 = pneg %p86
      $region42: #{unet_block_forward.2} parent=39 // pred_check_branch
        %1004 = sbr.rel (%p1002) target = $region44
      $region43: #{unet_block_forward.2} parent=39 // pred_region
        %p1005 = scmp.lt.s32.totalorder %s16, 1
        %s1006 = scalar_select %p1005, %s16, 1
        %s1007 = smul.addr %s1006, 8
        %s1008 = smul.addr %s1007, 4
        %s1009 = scalar_lea.vmem %s2, %s1008
      $region44: #{unet_block_forward.2} parent=39 // pred_fallthru
        _
      // Predicated region
      $region45: #{unet_block_forward.2} parent=39 // pred_check
        %p1010 = pneg %p112
      $region46: #{unet_block_forward.2} parent=39 // pred_check_branch
        %1012 = sbr.rel (%p1010) target = $region48
      $region47: #{unet_block_forward.2} parent=39 // pred_region
        %p1013 = scmp.lt.s32.totalorder %s16, 1
        %s1014 = scalar_select %p1013, %s16, 1
        %s1015 = smul.addr %s1014, 2
        %s1016 = scalar_lea.vmem %s3, %s1015
      $region48: #{unet_block_forward.2} parent=39 // pred_fallthru
        _
    $region40: #{unet_block_forward.2} parent=5 // pred_fallthru
      _
  $region6: #{unet_block_forward.2} parent=0 // loop_footer
    %s14 = sadd.s32 1, %s10
  $region7: #{unet_block_forward.2} parent=0 // loop_footer_branch
    %9 = sbr.rel target = $region3
  $region8: #{unet_block_forward.2} parent=0 // loop_exit
    _

</llo_original>
